<compile_context>
chip_gen: v7x
topology: tpu7x:2x2x1
jax: 0.10.0
libtpu: 0.0.40
codegen_flags: <defaults>
</compile_context>

<pallas_src>
import functools

import jax
import jax.numpy as jnp
from jax import lax
from jax.experimental import pallas as pl
from jax.experimental.pallas import tpu as pltpu


def _round_up(x, m):
    return -(-x // m) * m


def _scores_and_argmax(z, P, inv, k_real):
    """scr = (z @ P^T) * inv_norm, then first-occurrence argmax over K."""
    # MXU matmul in the operands' native dtype, f32 accumulation.
    scr = lax.dot_general(
        z, P,
        dimension_numbers=(((1,), (1,)), ((), ())),
        preferred_element_type=jnp.float32)        # (TB, Kp) f32
    scr = scr * inv                                # (1, Kp) broadcast (VPU)

    tb, kp = scr.shape
    kiota = lax.broadcasted_iota(jnp.int32, (tb, kp), 1)
    if k_real < kp:                                # static: mask zero-padded prototypes
        scr = jnp.where(kiota < k_real, scr, -jnp.inf)

    maxs = jnp.max(scr, axis=1, keepdims=True)     # same-array compare => safe ==
    idx = jnp.min(jnp.where(scr == maxs, kiota, kp), axis=1, keepdims=True)
    return kiota, idx


def _ot_head_gather_kernel(z_ref, p_ref, inv_ref, out_ref, *, k_real):
    P = p_ref[...]                                 # (Kp, dp), native dtype
    kiota, idx = _scores_and_argmax(z_ref[...], P, inv_ref[...], k_real)
    # One-hot gather on the MXU; one-hot in P's dtype reproduces P rows exactly.
    onehot = (kiota == idx).astype(P.dtype)        # (TB, Kp)
    cent = jnp.dot(onehot, P, preferred_element_type=jnp.float32)
    out_ref[...] = cent.astype(out_ref.dtype)


def _ot_head_argmax_kernel(z_ref, p_ref, inv_ref, idx_ref, *, k_real):
    _, idx = _scores_and_argmax(z_ref[...], p_ref[...], inv_ref[...], k_real)
    idx_ref[...] = idx                             # (TB, 1) int32


def ot_head_forward(z, P, tau=None, *, gather_in_kernel=None):
    """Pallas forward of OTHead.

    `tau` is accepted for API parity with the PyTorch module but is
    mathematically dead here (softmax is monotone and only the argmax is used).
    """
    del tau
    B, d = z.shape
    K, d_p = P.shape
    assert d == d_p, "feature dims of z and P must match"

    # --- lane-dense padding (do at model level ideally; cheap here) ---------
    d_pad = _round_up(d, 128)
    K_pad = _round_up(K, 128)
    z_pad = z if d_pad == d else jnp.pad(z, ((0, 0), (0, d_pad - d)))
    P_pad = P if (d_pad == d and K_pad == K) else jnp.pad(
        P, ((0, K_pad - K), (0, d_pad - d)))

    # --- prototype inverse norms, computed ONCE in the wrapper (exact) ------
    ssq = jnp.sum(P_pad.astype(jnp.float32) ** 2, axis=1)            # (Kp,)
    inv_norm = (1.0 / jnp.maximum(jnp.sqrt(ssq), 1e-12)).reshape(1, K_pad)
    inv_norm = inv_norm.astype(jnp.float32)

    # --- batch tiling: >=2 grid steps once B > 64 (v7x megacore), <=512 rows -
    if B <= 64:
        TB = B
    else:
        TB = min(512, _round_up(-(-B // 2), 8))
    num_steps = -(-B // TB)
    grid = (num_steps,)

    itm_z = jnp.dtype(z_pad.dtype).itemsize
    itm_p = jnp.dtype(P_pad.dtype).itemsize

    # Large K*d: return the argmax index and gather P[idx] with XLA instead of
    # spending a second TB*K*d matmul in the kernel.
    if gather_in_kernel is None:
        gather_in_kernel = (K_pad * d_pad * itm_p) <= (4 << 20)

    # --- VMEM budget (double-buffered z/out tiles, resident P, intermediates)
    est = (2 * TB * d_pad * itm_z
           + 2 * TB * d_pad * itm_p
           + 2 * K_pad * d_pad * itm_p
           + 2 * K_pad * 4
           + 6 * TB * K_pad * 4)
    vmem_limit = int(min(64 << 20, max(32 << 20, 2 * est)))
    # TODO(synk): on v7x with very large K*d, single-buffer the constant P /
    # inv_norm blocks (pipeline_mode=pl.Buffered(1)) or move to a K-streaming
    # online-argmax grid so P need not stay fully resident.

    in_specs = [
        pl.BlockSpec((TB, d_pad), lambda i: (i, 0),
                     memory_space=pltpu.MemorySpace.VMEM),
        pl.BlockSpec((K_pad, d_pad), lambda i: (0, 0),
                     memory_space=pltpu.MemorySpace.VMEM),
        pl.BlockSpec((1, K_pad), lambda i: (0, 0),
                     memory_space=pltpu.MemorySpace.VMEM),
    ]
    compiler_params = pltpu.CompilerParams(
        dimension_semantics=("parallel",),
        vmem_limit_bytes=vmem_limit)

    matmuls = 2 if gather_in_kernel else 1
    cost = pl.CostEstimate(
        flops=2 * matmuls * B * K_pad * d_pad,
        transcendentals=0,
        bytes_accessed=(B * d_pad * itm_z
                        + num_steps * K_pad * d_pad * itm_p
                        + B * d_pad * itm_p))

    if gather_in_kernel:
        out_pad = pl.pallas_call(
            functools.partial(_ot_head_gather_kernel, k_real=K),
            out_shape=jax.ShapeDtypeStruct((B, d_pad), P.dtype),
            grid=grid,
            in_specs=in_specs,
            out_specs=pl.BlockSpec((TB, d_pad), lambda i: (i, 0),
                                   memory_space=pltpu.MemorySpace.VMEM),
            compiler_params=compiler_params,
            cost_estimate=cost,
        )(z_pad, P_pad, inv_norm)
        return out_pad if d_pad == d else out_pad[:, :d]

    idx = pl.pallas_call(
        functools.partial(_ot_head_argmax_kernel, k_real=K),
        out_shape=jax.ShapeDtypeStruct((B, 1), jnp.int32),
        grid=grid,
        in_specs=in_specs,
        out_specs=pl.BlockSpec((TB, 1), lambda i: (i, 0),
                               memory_space=pltpu.MemorySpace.VMEM),
        compiler_params=compiler_params,
        cost_estimate=cost,
    )(z_pad, P_pad, inv_norm)
    # Gather the UN-normalized, UN-padded prototype rows with plain XLA.
    return jnp.take(P, idx[:, 0], axis=0)


def ot_head_reference(z, P, tau):
    # pure-JAX reference (mirrors the PyTorch module exactly)
    Pn = P / jnp.maximum(jnp.linalg.norm(P, axis=1, keepdims=True), 1e-12)
    scr = z @ Pn.T / tau
    q = jax.nn.softmax(scr, axis=1)
    idx = jnp.argmax(q, axis=1)
    return P[idx]


if __name__ == "__main__":
    key = jax.random.PRNGKey(0)
    B, d_tsk, K = 8, 32, 16
    tau = 0.1

    k1, k2 = jax.random.split(key)
    # nn.init.normal_(self.P): standard-normal prototypes (deterministic here)
    P = jax.random.normal(k1, (K, d_tsk), dtype=jnp.float32)
    z = jax.random.normal(k2, (B, d_tsk), dtype=jnp.float32)

    ref = ot_head_reference(z, P, tau)

    out_gather = ot_head_forward(z, P, tau)                          # in-kernel one-hot gather
    out_index = ot_head_forward(z, P, tau, gather_in_kernel=False)   # argmax index + XLA gather
    jax.block_until_ready((out_gather, out_index))

    assert out_gather.shape == (B, d_tsk) and out_gather.dtype == P.dtype
    assert out_index.shape == (B, d_tsk) and out_index.dtype == P.dtype
    assert jnp.allclose(out_gather, ref, atol=1e-5), "gather-mode mismatch vs reference"
    assert jnp.allclose(out_index, ref, atol=1e-5), "index-mode mismatch vs reference"
    print("KERNEL_OK")
</pallas_src>

<mosaic_0001>
module attributes {stable_mosaic.version = 11 : i64} {
  func.func @_ot_head_gather_kernel(%arg0: i32, %arg1: memref<8x128xf32, #tpu.memory_space<vmem>>, %arg2: memref<128x128xf32, #tpu.memory_space<vmem>>, %arg3: memref<1x128xf32, #tpu.memory_space<vmem>>, %arg4: memref<8x128xf32, #tpu.memory_space<vmem>>) attributes {dimension_semantics = [#tpu.dimension_semantics<parallel>], iteration_bounds = array<i64: 1>, scalar_prefetch = 0 : i64, scratch_operands = 0 : i64, tpu.core_type = #tpu.core_type<tc>, window_params = [{transform_indices = @transform_0, window_bounds = array<i64: 8, 128>}, {pipeline_mode = #tpu.pipeline_mode<synchronous>, transform_indices = @transform_1, window_bounds = array<i64: 128, 128>}, {pipeline_mode = #tpu.pipeline_mode<synchronous>, transform_indices = @transform_2, window_bounds = array<i64: 1, 128>}, {transform_indices = @transform_3, window_bounds = array<i64: 8, 128>}]} {
    %c0 = arith.constant 0 : index
    %c0_0 = arith.constant 0 : index
    %0 = vector.load %arg2[%c0, %c0_0] : memref<128x128xf32, #tpu.memory_space<vmem>>, vector<128x128xf32>
    %c0_1 = arith.constant 0 : index
    %c0_2 = arith.constant 0 : index
    %1 = vector.load %arg1[%c0_1, %c0_2] : memref<8x128xf32, #tpu.memory_space<vmem>>, vector<8x128xf32>
    %c0_3 = arith.constant 0 : index
    %c0_4 = arith.constant 0 : index
    %2 = vector.load %arg3[%c0_3, %c0_4] : memref<1x128xf32, #tpu.memory_space<vmem>>, vector<1x128xf32>
    %cst = arith.constant dense<0.000000e+00> : vector<8x128xf32>
    %3 = tpu.matmul %1, %0, %cst {dimension_numbers = #tpu.dot_dimension_numbers<[1], [1], [0], [0], [0, 0, 1, 0], [], []>} : vector<8x128xf32>, vector<128x128xf32>, vector<8x128xf32> -> vector<8x128xf32>
    %4 = vector.broadcast %2 : vector<1x128xf32> to vector<8x128xf32>
    %5 = arith.mulf %3, %4 : vector<8x128xf32>
    %6 = tpu.iota {dimensions = array<i32: 1>} : vector<8x128xi32>
    %c16_i32 = arith.constant 16 : i32
    %7 = vector.broadcast %c16_i32 : i32 to vector<8x128xi32>
    %8 = arith.cmpi slt, %6, %7 : vector<8x128xi32>
    %cst_5 = arith.constant 0xFF800000 : f32
    %9 = vector.broadcast %cst_5 : f32 to vector<8x128xf32>
    %10 = arith.select %8, %5, %9 : vector<8x128xi1>, vector<8x128xf32>
    %cst_6 = arith.constant dense<0xFF800000> : vector<8xf32>
    %11 = vector.multi_reduction <maximumf>, %10, %cst_6 [1] : vector<8x128xf32> to vector<8xf32>
    %12 = vector.shape_cast %11 : vector<8xf32> to vector<8x1xf32>
    %13 = vector.broadcast %12 : vector<8x1xf32> to vector<8x128xf32>
    %14 = arith.cmpf oeq, %10, %13 : vector<8x128xf32>
    %c128_i32 = arith.constant 128 : i32
    %15 = vector.broadcast %c128_i32 : i32 to vector<8x128xi32>
    %16 = arith.select %14, %6, %15 : vector<8x128xi1>, vector<8x128xi32>
    %cst_7 = arith.constant dense<2147483647> : vector<8xi32>
    %17 = vector.multi_reduction <minsi>, %16, %cst_7 [1] : vector<8x128xi32> to vector<8xi32>
    %18 = vector.shape_cast %17 : vector<8xi32> to vector<8x1xi32>
    %19 = vector.broadcast %18 : vector<8x1xi32> to vector<8x128xi32>
    %20 = arith.cmpi eq, %6, %19 : vector<8x128xi32>
    %21 = arith.extui %20 : vector<8x128xi1> to vector<8x128xi32>
    %22 = arith.sitofp %21 : vector<8x128xi32> to vector<8x128xf32>
    %cst_8 = arith.constant dense<0.000000e+00> : vector<8x128xf32>
    %23 = tpu.matmul %22, %0, %cst_8 {dimension_numbers = #tpu.dot_dimension_numbers<[1], [0], [0], [1], [0, 0, 1, 1], [], []>} : vector<8x128xf32>, vector<128x128xf32>, vector<8x128xf32> -> vector<8x128xf32>
    %c0_9 = arith.constant 0 : index
    %c0_10 = arith.constant 0 : index
    %24 = vector.load %arg4[%c0_9, %c0_10] : memref<8x128xf32, #tpu.memory_space<vmem>>, vector<8x128xf32>
    tpu.vector_store %arg4[%c0_9, %c0_10], %23 {strides = array<i32>} : memref<8x128xf32, #tpu.memory_space<vmem>>, vector<8x128xf32>,
    return
  }
  func.func @transform_0(%arg0: i32) -> (i32, i32) {
    %c0_i32 = arith.constant 0 : i32
    %c0_i32_0 = arith.constant 0 : i32
    return %arg0, %c0_i32 : i32, i32
  }
  func.func @transform_1(%arg0: i32) -> (i32, i32) {
    %c0_i32 = arith.constant 0 : i32
    %c0_i32_0 = arith.constant 0 : i32
    %c0_i32_1 = arith.constant 0 : i32
    return %c0_i32, %c0_i32_0 : i32, i32
  }
  func.func @transform_2(%arg0: i32) -> (i32, i32) {
    %c0_i32 = arith.constant 0 : i32
    %c0_i32_0 = arith.constant 0 : i32
    %c0_i32_1 = arith.constant 0 : i32
    return %c0_i32, %c0_i32_0 : i32, i32
  }
  func.func @transform_3(%arg0: i32) -> (i32, i32) {
    %c0_i32 = arith.constant 0 : i32
    %c0_i32_0 = arith.constant 0 : i32
    return %arg0, %c0_i32 : i32, i32
  }
}

</mosaic_0001>

<llo_original>
// kernel: tpu_custom_call.1
$region0: #{tpu_custom_call.1}
  #allocation0 [shape = 'u32[]', space=smem, size = 0x4, offset = 0x4, fixed_abs, tag = 'smem constant byte address 0x4 - core index']
  #allocation1 [shape = 'u32[144,128]{1,0:T(1,128)}', space=vmem, size = 0x12000, scoped, tag = 'internal scratch']
  %s0 = inlined_call_operand.hbm [shape: f32[8,128], index: 0, kind: input, shape index: {}]
  %s1 = inlined_call_operand.hbm [shape: f32[128,128], index: 1, kind: input, shape index: {}]
  %s2 = inlined_call_operand.vmem [shape: f32[1,128], index: 2, kind: input, shape index: {}]
  %s3 = inlined_call_operand.hbm [shape: f32[8,128], index: 3, kind: output, shape index: {}]
  %s4 = sld [smem:[#allocation0]]
  $region30: #{tpu_custom_call.1} parent=0
    _
  %s6 = ssub.s32 1, %s4
  %s7 = scalar_select 0, %s6, %s4
  $region1: #{tpu_custom_call.1} parent=0
    #allocation2 [shape = 'u8[4096]{0}', space=vmem, size = 0x1000, scoped, tag = 'input window, operand 0, single buffered']
    #allocation3 [shape = 's32[1]{0}', space=sflag, size = 0x4, scoped, tag = 'scoped memory for tpu_custom_call.1']
    #allocation4 [shape = 's32[1]{0}', space=sflag, size = 0x4, scoped, tag = 'scoped memory for tpu_custom_call.1']
    #allocation5 [shape = 'u8[65536]{0}', space=vmem, size = 0x10000, scoped, tag = 'input window, operand 1, single buffered']
    #allocation6 [shape = 's32[1]{0}', space=sflag, size = 0x4, scoped, tag = 'scoped memory for tpu_custom_call.1']
    #allocation7 [shape = 'u8[4096]{0}', space=vmem, size = 0x1000, scoped, tag = 'output window, operand 0, single buffered']
    %8 = vsyncpa [#allocation3], 0
    %9 = vsyncpa [#allocation6], 0
    %10 = vsyncpa [#allocation4], 0
    // Predicated region
    $region2: #{tpu_custom_call.1} parent=1 // pred_check
      _
    $region3: #{tpu_custom_call.1} parent=1 // pred_check_branch
      %12 = sbr.rel (0) target = $region5
    $region4: #{tpu_custom_call.1} parent=1 // pred_region
      %s14 = ssub.s32 128, 128
      %15 = vsyncadd [#allocation3], %s14
      %s17 = sshll.u32 [#allocation2], 4
      %s18 = int_to_ptr.vmem [resolvable:$true] %s17
      %20 = dma.hbm_to_vmem [thread:$0]  %s0, 128, %s18, [#allocation3]
    $region5: #{tpu_custom_call.1} parent=1 // pred_fallthru
      _
    // Predicated region
    $region6: #{tpu_custom_call.1} parent=1 // pred_check
      _
    $region7: #{tpu_custom_call.1} parent=1 // pred_check_branch
      %22 = sbr.rel (0) target = $region9
    $region8: #{tpu_custom_call.1} parent=1 // pred_region
      %s24 = ssub.s32 2048, 2048
      %25 = vsyncadd [#allocation6], %s24
      %s26 = sshll.u32 [#allocation5], 4
      %s27 = int_to_ptr.vmem [resolvable:$true] %s26
      %32 = dma.hbm_to_vmem [thread:$0]  %s1, 2048, %s27, [#allocation6], 128, 128, 8
    $region9: #{tpu_custom_call.1} parent=1 // pred_fallthru
      _
    // Predicated region
    $region10: #{tpu_custom_call.1} parent=1 // pred_check
      _
    $region11: #{tpu_custom_call.1} parent=1 // pred_check_branch
      %34 = sbr.rel (0) target = $region13
    $region12: #{tpu_custom_call.1} parent=1 // pred_region
      _
    $region13: #{tpu_custom_call.1} parent=1 // pred_fallthru
      _
    // Predicated region
    $region14: #{tpu_custom_call.1} parent=1 // pred_check
      _
    $region15: #{tpu_custom_call.1} parent=1 // pred_check_branch
      %36 = sbr.rel (0) target = $region17
    $region16: #{tpu_custom_call.1} parent=1 // pred_region
      %37 = dma.done [#allocation3], 128
    $region17: #{tpu_custom_call.1} parent=1 // pred_fallthru
      _
    // Predicated region
    $region18: #{tpu_custom_call.1} parent=1 // pred_check
      _
    $region19: #{tpu_custom_call.1} parent=1 // pred_check_branch
      %39 = sbr.rel (0) target = $region21
    $region20: #{tpu_custom_call.1} parent=1 // pred_region
      %40 = dma.done [#allocation6], 2048
    $region21: #{tpu_custom_call.1} parent=1 // pred_fallthru
      _
    %v41 = vld [vmem:[#allocation5] sm:$0xff]
    %v42 = vld [vmem:[#allocation5 + $0x8] sm:$0xff]
    %v43 = vld [vmem:[#allocation5 + $0x10] sm:$0xff]
    %v44 = vld [vmem:[#allocation5 + $0x18] sm:$0xff]
    %v45 = vld [vmem:[#allocation5 + $0x20] sm:$0xff]
    %v46 = vld [vmem:[#allocation5 + $0x28] sm:$0xff]
    %v47 = vld [vmem:[#allocation5 + $0x30] sm:$0xff]
    %v48 = vld [vmem:[#allocation5 + $0x38] sm:$0xff]
    %v49 = vld [vmem:[#allocation5 + $0x40] sm:$0xff]
    %v50 = vld [vmem:[#allocation5 + $0x48] sm:$0xff]
    %v51 = vld [vmem:[#allocation5 + $0x50] sm:$0xff]
    %v52 = vld [vmem:[#allocation5 + $0x58] sm:$0xff]
    %v53 = vld [vmem:[#allocation5 + $0x60] sm:$0xff]
    %v54 = vld [vmem:[#allocation5 + $0x68] sm:$0xff]
    %v55 = vld [vmem:[#allocation5 + $0x70] sm:$0xff]
    %v56 = vld [vmem:[#allocation5 + $0x78] sm:$0xff]
    %v57 = vld [vmem:[#allocation2] sm:$0xff]
    %v58 = vld [vmem:[%s2] sm:$0x1]
    %59 = vmatprep.subr.mxu0 0.0
    %60 = vmatpush1.xpose.msra.mxu0 %v41
    %61 = vmatprep.subr.mxu0 0.0
    %62 = vmatpush1.xpose.msra.mxu0 %v42
    %63 = vmatprep.subr.mxu0 0.0
    %64 = vmatpush1.xpose.msra.mxu0 %v43
    %65 = vmatprep.subr.mxu0 0.0
    %66 = vmatpush1.xpose.msra.mxu0 %v44
    %67 = vmatprep.subr.mxu0 0.0
    %68 = vmatpush1.xpose.msra.mxu0 %v45
    %69 = vmatprep.subr.mxu0 0.0
    %70 = vmatpush1.xpose.msra.mxu0 %v46
    %71 = vmatprep.subr.mxu0 0.0
    %72 = vmatpush1.xpose.msra.mxu0 %v47
    %73 = vmatprep.subr.mxu0 0.0
    %74 = vmatpush1.xpose.msra.mxu0 %v48
    %75 = vmatprep.subr.mxu0 0.0
    %76 = vmatpush1.xpose.msra.mxu0 %v49
    %77 = vmatprep.subr.mxu0 0.0
    %78 = vmatpush1.xpose.msra.mxu0 %v50
    %79 = vmatprep.subr.mxu0 0.0
    %80 = vmatpush1.xpose.msra.mxu0 %v51
    %81 = vmatprep.subr.mxu0 0.0
    %82 = vmatpush1.xpose.msra.mxu0 %v52
    %83 = vmatprep.subr.mxu0 0.0
    %84 = vmatpush1.xpose.msra.mxu0 %v53
    %85 = vmatprep.subr.mxu0 0.0
    %86 = vmatpush1.xpose.msra.mxu0 %v54
    %87 = vmatprep.subr.mxu0 0.0
    %88 = vmatpush1.xpose.msra.mxu0 %v55
    %89 = vmatprep.subr.mxu0 0.0
    %90 = vmatpush1.xpose.msra.mxu0 %v56
    %91 = vmatprep.subr.mxu0 0.0
    %92 = vmatpush1.xpose.msra.mxu0 0.0
    %93 = vmatprep.subr.mxu0 0.0
    %94 = vmatpush1.xpose.msra.mxu0 0.0
    %95 = vmatprep.subr.mxu0 0.0
    %96 = vmatpush1.xpose.msra.mxu0 0.0
    %97 = vmatprep.subr.mxu0 0.0
    %98 = vmatpush1.xpose.msra.mxu0 0.0
    %99 = vmatprep.subr.mxu0 0.0
    %100 = vmatpush1.xpose.msra.mxu0 0.0
    %101 = vmatprep.subr.mxu0 0.0
    %102 = vmatpush1.xpose.msra.mxu0 0.0
    %103 = vmatprep.subr.mxu0 0.0
    %104 = vmatpush1.xpose.msra.mxu0 0.0
    %105 = vmatprep.subr.mxu0 0.0
    %106 = vmatpush1.xpose.msra.mxu0 0.0
    %107 = vmatprep.subr.mxu0 0.0
    %108 = vmatpush1.xpose.msra.mxu0 0.0
    %109 = vmatprep.subr.mxu0 0.0
    %110 = vmatpush1.xpose.msra.mxu0 0.0
    %111 = vmatprep.subr.mxu0 0.0
    %112 = vmatpush1.xpose.msra.mxu0 0.0
    %113 = vmatprep.subr.mxu0 0.0
    %114 = vmatpush1.xpose.msra.mxu0 0.0
    %115 = vmatprep.subr.mxu0 0.0
    %116 = vmatpush1.xpose.msra.mxu0 0.0
    %117 = vmatprep.subr.mxu0 0.0
    %118 = vmatpush1.xpose.msra.mxu0 0.0
    %119 = vmatprep.subr.mxu0 0.0
    %120 = vmatpush1.xpose.msra.mxu0 0.0
    %121 = vmatprep.subr.mxu0 0.0
    %122 = vmatpush1.xpose.msra.mxu0 0.0
    %123 = vmatprep.mubr.f32.mxu0 0.0
    %124 = vmatmul.mubr.f32.gmra.mrb[0].mxu0 %v57
    %v125 = vpop.f32.mrb[0].mxu0
    %v126 = vadd.f32 0.0, %v125
    %v127 = vpop.f32.mrb[0].mxu0
    %128 = vdwg.mxu0
    %v130 = vlaneseq
    %v131 = vshrl.u32 %v130, 7
    %v132 = vsub.s32 0, %v131
    %v133 = vrot.slane %v58, %v132
    %v135 = vmul.f32 %v126, %v133
    %v136 = vlaneseq
    %v137 = vand.u32 %v136, 127
    %vm138 = vcmp.lt.s32.totalorder %v137, 16
    %v139 = vsel %vm138, %v135, -inf
    %140 = vmax.xlane.f32.xlu0 %v139
    %v141 = vpop.xlane.xlu0 %140
    %vm142 = vcmp.eq.f32.partialorder %v139, %v141
    %v143 = vsel %vm142, %v137, 128
    %v144 = vand.u32 %v143, 65535
    %v145 = vshra.s32 %v143, 16
    %v146 = vcvt.s32.f32 %v144
    %v147 = vcvt.s32.f32 %v145
    %148 = vmin.xlane.f32.xlu0 %v147
    %v149 = vpop.xlane.xlu0 %148
    %vm150 = vcmp.eq.f32.partialorder %v147, %v149
    %v151 = vsel %vm150, %v146, inf
    %152 = vmin.xlane.f32.xlu0 %v151
    %v153 = vpop.xlane.xlu0 %152
    %v154 = vcvt.f32.s32 %v153
    %v155 = vcvt.f32.s32 %v149
    %v156 = vshll.u32 %v155, 16
    %v157 = vadd.s32 %v156, %v154
    %vm158 = vcmp.eq.s32.totalorder %v137, %v157
    %v159 = vsel %vm158, 1, 0
    %v160 = vcvt.s32.f32 %v159
    %161 = vmatprep.subr.mxu0 0.0
    %162 = vmatpush1.msra.mxu0 %v41
    %163 = vmatprep.subr.mxu0 0.0
    %164 = vmatpush1.msra.mxu0 %v42
    %165 = vmatprep.subr.mxu0 0.0
    %166 = vmatpush1.msra.mxu0 %v43
    %167 = vmatprep.subr.mxu0 0.0
    %168 = vmatpush1.msra.mxu0 %v44
    %169 = vmatprep.subr.mxu0 0.0
    %170 = vmatpush1.msra.mxu0 %v45
    %171 = vmatprep.subr.mxu0 0.0
    %172 = vmatpush1.msra.mxu0 %v46
    %173 = vmatprep.subr.mxu0 0.0
    %174 = vmatpush1.msra.mxu0 %v47
    %175 = vmatprep.subr.mxu0 0.0
    %176 = vmatpush1.msra.mxu0 %v48
    %177 = vmatprep.subr.mxu0 0.0
    %178 = vmatpush1.msra.mxu0 %v49
    %179 = vmatprep.subr.mxu0 0.0
    %180 = vmatpush1.msra.mxu0 %v50
    %181 = vmatprep.subr.mxu0 0.0
    %182 = vmatpush1.msra.mxu0 %v51
    %183 = vmatprep.subr.mxu0 0.0
    %184 = vmatpush1.msra.mxu0 %v52
    %185 = vmatprep.subr.mxu0 0.0
    %186 = vmatpush1.msra.mxu0 %v53
    %187 = vmatprep.subr.mxu0 0.0
    %188 = vmatpush1.msra.mxu0 %v54
    %189 = vmatprep.subr.mxu0 0.0
    %190 = vmatpush1.msra.mxu0 %v55
    %191 = vmatprep.subr.mxu0 0.0
    %192 = vmatpush1.msra.mxu0 %v56
    %193 = vmatprep.subr.mxu0 0.0
    %194 = vmatpush1.msra.mxu0 0.0
    %195 = vmatprep.subr.mxu0 0.0
    %196 = vmatpush1.msra.mxu0 0.0
    %197 = vmatprep.subr.mxu0 0.0
    %198 = vmatpush1.msra.mxu0 0.0
    %199 = vmatprep.subr.mxu0 0.0
    %200 = vmatpush1.msra.mxu0 0.0
    %201 = vmatprep.subr.mxu0 0.0
    %202 = vmatpush1.msra.mxu0 0.0
    %203 = vmatprep.subr.mxu0 0.0
    %204 = vmatpush1.msra.mxu0 0.0
    %205 = vmatprep.subr.mxu0 0.0
    %206 = vmatpush1.msra.mxu0 0.0
    %207 = vmatprep.subr.mxu0 0.0
    %208 = vmatpush1.msra.mxu0 0.0
    %209 = vmatprep.subr.mxu0 0.0
    %210 = vmatpush1.msra.mxu0 0.0
    %211 = vmatprep.subr.mxu0 0.0
    %212 = vmatpush1.msra.mxu0 0.0
    %213 = vmatprep.subr.mxu0 0.0
    %214 = vmatpush1.msra.mxu0 0.0
    %215 = vmatprep.subr.mxu0 0.0
    %216 = vmatpush1.msra.mxu0 0.0
    %217 = vmatprep.subr.mxu0 0.0
    %218 = vmatpush1.msra.mxu0 0.0
    %219 = vmatprep.subr.mxu0 0.0
    %220 = vmatpush1.msra.mxu0 0.0
    %221 = vmatprep.subr.mxu0 0.0
    %222 = vmatpush1.msra.mxu0 0.0
    %223 = vmatprep.subr.mxu0 0.0
    %224 = vmatpush1.msra.mxu0 0.0
    %225 = vmatprep.mubr.f32.mxu0 0.0
    %226 = vmatmul.mubr.f32.gmra.mrb[0].mxu0 %v160
    %v227 = vpop.f32.mrb[0].mxu0
    %v228 = vadd.f32 0.0, %v227
    %v229 = vpop.f32.mrb[0].mxu0
    %230 = vdwg.mxu0
    %231 = vst [vmem:[#allocation7] sm:$0xff] %v228
    // Predicated region
    $region22: #{tpu_custom_call.1} parent=1 // pred_check
      _
    $region23: #{tpu_custom_call.1} parent=1 // pred_check_branch
      %233 = sbr.rel (0) target = $region25
    $region24: #{tpu_custom_call.1} parent=1 // pred_region
      %s235 = ssub.s32 128, 128
      %236 = vsyncadd [#allocation4], %s235
      %s238 = sshll.u32 [#allocation7], 4
      %s239 = int_to_ptr.vmem [resolvable:$true] %s238
      %241 = dma.vmem_to_hbm [thread:$0]  %s239, 128, %s3, [#allocation4]
    $region25: #{tpu_custom_call.1} parent=1 // pred_fallthru
      _
    // Predicated region
    $region26: #{tpu_custom_call.1} parent=1 // pred_check
      _
    $region27: #{tpu_custom_call.1} parent=1 // pred_check_branch
      %243 = sbr.rel (0) target = $region29
    $region28: #{tpu_custom_call.1} parent=1 // pred_region
      %244 = dma.done [#allocation4], 128
    $region29: #{tpu_custom_call.1} parent=1 // pred_fallthru
      _
    %245 = vsyncpa [#allocation3], 1
    %246 = vsyncpa [#allocation6], 1
    %247 = vsyncpa [#allocation4], 1

</llo_original>
